<compile_context>
chip_gen: v7x
topology: tpu7x:2x2x1
jax: 0.10.0
libtpu: 0.0.40
codegen_flags: <defaults>
</compile_context>

<pallas_src>
import jax
import jax.numpy as jnp
from jax.experimental import pallas as pl
from jax.experimental.pallas import tpu as pltpu

_VMEM = pl.BlockSpec(memory_space=pltpu.MemorySpace.VMEM)


# ----------------------------- Pallas kernel --------------------------------

def _make_multitask_loss_kernel(cols, weights, n_tasks, batch):
    """Build a fused kernel computing all per-task MSEs and the weighted total.

    cols    : tuple[int]   -- static label-column index per task
    weights : tuple[float] -- static loss weight per task
    batch   : int          -- number of (squeezed) elements per task
    Kernel refs:
      refs[0]              : label, [n_out, B] (rows lane-dense)
      refs[1 : 1+n_tasks]  : predictions, each [1, B]
      refs[1+n_tasks]      : output, [1, n_tasks + 1]  (losses..., total)
    """
    inv_n = 1.0 / float(batch)

    def kernel(*refs):
        label_ref = refs[0]
        pred_refs = refs[1:1 + n_tasks]
        o_ref = refs[1 + n_tasks]

        total = jnp.zeros((1, 1), jnp.float32)
        for t in range(n_tasks):                       # static unroll over tasks
            pred = pred_refs[t][...]                   # [1, B]
            lab = label_ref[cols[t]:cols[t] + 1, :]    # [1, B] (static row slice)
            d = pred - lab
            mse = jnp.sum(d * d, axis=1, keepdims=True) * inv_n   # [1, 1]
            o_ref[:, t:t + 1] = mse
            total = total + weights[t] * mse
        o_ref[:, n_tasks:n_tasks + 1] = total

    return kernel


# ------------------------------ module port ----------------------------------

class MultiTaskLoss:
    """JAX/Pallas port of MultiTaskLoss (forward pass only)."""

    def __init__(self, training_params):
        self.output_names = list(training_params['output_names'])
        main_task = self.output_names[0]
        self.loss_weights = {}
        for task in training_params['regressor_names']:
            if main_task in task:
                self.loss_weights[task] = float(
                    training_params['loss_weights']['main_task'])
            else:
                n_aux = len(self.output_names) - 1
                if n_aux == 0:
                    self.loss_weights[task] = 0.0
                else:
                    self.loss_weights[task] = float(
                        training_params['loss_weights']['auxillary_task']) / n_aux

    def __call__(self, output, label):
        names = list(output.keys())
        n = len(names)
        cols = tuple(self.output_names.index(name.split('-')[0]) for name in names)
        weights = tuple(float(self.loss_weights[name]) for name in names)

        # label[:, [idx]].float().squeeze() per task  ->  pass transposed once,
        # index rows (lane-dense) inside the kernel with static indices.
        label_t = jnp.asarray(label, jnp.float32).T           # [n_out, B]
        batch = label_t.shape[1]

        preds = []
        for name in names:
            p = jnp.squeeze(jnp.asarray(output[name], jnp.float32))
            # TODO(synk): PyTorch MSELoss broadcasting between mismatched
            # squeezed pred/label shapes is not supported; shapes must match.
            preds.append(p.reshape(1, batch))                 # [1, B] lane-dense

        kernel = _make_multitask_loss_kernel(cols, weights, n, batch)
        out = pl.pallas_call(
            kernel,
            out_shape=jax.ShapeDtypeStruct((1, n + 1), jnp.float32),
            in_specs=[_VMEM] * (1 + n),
            out_specs=_VMEM,
        )(label_t, *preds)

        losses = {name: out[0, t] for t, name in enumerate(names)}
        losses['total'] = out[0, n]
        return losses


# ------------------------------- reference -----------------------------------

def _reference(loss_module, output, label):
    label = jnp.asarray(label, jnp.float32)
    losses = {}
    total = jnp.float32(0.0)
    for name in output.keys():
        col = loss_module.output_names.index(name.split('-')[0])
        pred = jnp.squeeze(jnp.asarray(output[name], jnp.float32))
        lab = jnp.squeeze(label[:, col])
        mse = jnp.mean((pred - lab) ** 2)
        losses[name] = mse
        total = total + loss_module.loss_weights[name] * mse
    losses['total'] = total
    return losses


# ---------------------------------- main --------------------------------------

if __name__ == "__main__":
    key = jax.random.PRNGKey(0)
    k1, k2, k3, k4 = jax.random.split(key, 4)

    B = 8
    training_params = {
        'output_names': ['resp', 'hr'],                  # main task = 'resp'
        'regressor_names': ['resp', 'hr', 'resp-late'],  # 'resp-late' -> main weight
        'device': None,                                  # unused in the JAX port
        'loss_weights': {'main_task': 1.0, 'auxillary_task': 0.5},
    }

    loss_fn = MultiTaskLoss(training_params)

    output = {
        'resp':      jax.random.normal(k1, (B, 1), jnp.float32),
        'hr':        jax.random.normal(k2, (B, 1), jnp.float32),
        'resp-late': jax.random.normal(k3, (B, 1), jnp.float32),
    }
    label = jax.random.normal(
        k4, (B, len(training_params['output_names'])), jnp.float32)

    losses = loss_fn(output, label)
    jax.block_until_ready(losses)

    ref = _reference(loss_fn, output, label)
    for name in list(output.keys()) + ['total']:
        assert jnp.allclose(losses[name], ref[name], rtol=1e-5, atol=1e-5), name
    assert losses['total'].shape == ()

    print("KERNEL_OK")
</pallas_src>

<mosaic_0001>
module attributes {stable_mosaic.version = 11 : i64} {
  func.func @kernel(%arg0: memref<2x8xf32, #tpu.memory_space<vmem>>, %arg1: memref<1x8xf32, #tpu.memory_space<vmem>>, %arg2: memref<1x8xf32, #tpu.memory_space<vmem>>, %arg3: memref<1x8xf32, #tpu.memory_space<vmem>>, %arg4: memref<1x4xf32, #tpu.memory_space<vmem>>) attributes {dimension_semantics = [], scalar_prefetch = 0 : i64, scratch_operands = 0 : i64, tpu.core_type = #tpu.core_type<tc>} {
    %cst = arith.constant 0.000000e+00 : f32
    %0 = vector.broadcast %cst : f32 to vector<1x1xf32>
    %c0 = arith.constant 0 : index
    %c0_0 = arith.constant 0 : index
    %1 = vector.load %arg1[%c0, %c0_0] : memref<1x8xf32, #tpu.memory_space<vmem>>, vector<1x8xf32>
    %c0_1 = arith.constant 0 : index
    %c0_2 = arith.constant 0 : index
    %2 = vector.load %arg0[%c0_1, %c0_2] : memref<2x8xf32, #tpu.memory_space<vmem>>, vector<1x8xf32>
    %3 = arith.subf %1, %2 : vector<1x8xf32>
    %4 = arith.mulf %3, %3 : vector<1x8xf32>
    %cst_3 = arith.constant dense<0.000000e+00> : vector<1xf32>
    %5 = vector.multi_reduction <add>, %4, %cst_3 [1] : vector<1x8xf32> to vector<1xf32>
    %6 = vector.shape_cast %5 : vector<1xf32> to vector<1x1xf32>
    %cst_4 = arith.constant 1.250000e-01 : f32
    %7 = vector.broadcast %cst_4 : f32 to vector<1x1xf32>
    %8 = arith.mulf %6, %7 : vector<1x1xf32>
    %c0_5 = arith.constant 0 : index
    %c0_6 = arith.constant 0 : index
    %9 = vector.load %arg4[%c0_5, %c0_6] : memref<1x4xf32, #tpu.memory_space<vmem>>, vector<1x1xf32>
    tpu.vector_store %arg4[%c0_5, %c0_6], %8 {strides = array<i32>} : memref<1x4xf32, #tpu.memory_space<vmem>>, vector<1x1xf32>,
    %cst_7 = arith.constant 1.000000e+00 : f32
    %10 = vector.broadcast %cst_7 : f32 to vector<1x1xf32>
    %11 = arith.mulf %10, %8 : vector<1x1xf32>
    %12 = arith.addf %0, %11 : vector<1x1xf32>
    %c0_8 = arith.constant 0 : index
    %c0_9 = arith.constant 0 : index
    %13 = vector.load %arg2[%c0_8, %c0_9] : memref<1x8xf32, #tpu.memory_space<vmem>>, vector<1x8xf32>
    %c1 = arith.constant 1 : index
    %c0_10 = arith.constant 0 : index
    %14 = vector.load %arg0[%c1, %c0_10] : memref<2x8xf32, #tpu.memory_space<vmem>>, vector<1x8xf32>
    %15 = arith.subf %13, %14 : vector<1x8xf32>
    %16 = arith.mulf %15, %15 : vector<1x8xf32>
    %cst_11 = arith.constant dense<0.000000e+00> : vector<1xf32>
    %17 = vector.multi_reduction <add>, %16, %cst_11 [1] : vector<1x8xf32> to vector<1xf32>
    %18 = vector.shape_cast %17 : vector<1xf32> to vector<1x1xf32>
    %cst_12 = arith.constant 1.250000e-01 : f32
    %19 = vector.broadcast %cst_12 : f32 to vector<1x1xf32>
    %20 = arith.mulf %18, %19 : vector<1x1xf32>
    %c0_13 = arith.constant 0 : index
    %c1_14 = arith.constant 1 : index
    %21 = vector.load %arg4[%c0_13, %c1_14] : memref<1x4xf32, #tpu.memory_space<vmem>>, vector<1x1xf32>
    tpu.vector_store %arg4[%c0_13, %c1_14], %20 {strides = array<i32>} : memref<1x4xf32, #tpu.memory_space<vmem>>, vector<1x1xf32>,
    %cst_15 = arith.constant 5.000000e-01 : f32
    %22 = vector.broadcast %cst_15 : f32 to vector<1x1xf32>
    %23 = arith.mulf %22, %20 : vector<1x1xf32>
    %24 = arith.addf %12, %23 : vector<1x1xf32>
    %c0_16 = arith.constant 0 : index
    %c0_17 = arith.constant 0 : index
    %25 = vector.load %arg3[%c0_16, %c0_17] : memref<1x8xf32, #tpu.memory_space<vmem>>, vector<1x8xf32>
    %c0_18 = arith.constant 0 : index
    %c0_19 = arith.constant 0 : index
    %26 = vector.load %arg0[%c0_18, %c0_19] : memref<2x8xf32, #tpu.memory_space<vmem>>, vector<1x8xf32>
    %27 = arith.subf %25, %26 : vector<1x8xf32>
    %28 = arith.mulf %27, %27 : vector<1x8xf32>
    %cst_20 = arith.constant dense<0.000000e+00> : vector<1xf32>
    %29 = vector.multi_reduction <add>, %28, %cst_20 [1] : vector<1x8xf32> to vector<1xf32>
    %30 = vector.shape_cast %29 : vector<1xf32> to vector<1x1xf32>
    %cst_21 = arith.constant 1.250000e-01 : f32
    %31 = vector.broadcast %cst_21 : f32 to vector<1x1xf32>
    %32 = arith.mulf %30, %31 : vector<1x1xf32>
    %c0_22 = arith.constant 0 : index
    %c2 = arith.constant 2 : index
    %33 = vector.load %arg4[%c0_22, %c2] : memref<1x4xf32, #tpu.memory_space<vmem>>, vector<1x1xf32>
    tpu.vector_store %arg4[%c0_22, %c2], %32 {strides = array<i32>} : memref<1x4xf32, #tpu.memory_space<vmem>>, vector<1x1xf32>,
    %cst_23 = arith.constant 1.000000e+00 : f32
    %34 = vector.broadcast %cst_23 : f32 to vector<1x1xf32>
    %35 = arith.mulf %34, %32 : vector<1x1xf32>
    %36 = arith.addf %24, %35 : vector<1x1xf32>
    %c0_24 = arith.constant 0 : index
    %c3 = arith.constant 3 : index
    %37 = vector.load %arg4[%c0_24, %c3] : memref<1x4xf32, #tpu.memory_space<vmem>>, vector<1x1xf32>
    tpu.vector_store %arg4[%c0_24, %c3], %36 {strides = array<i32>} : memref<1x4xf32, #tpu.memory_space<vmem>>, vector<1x1xf32>,
    return
  }
}

</mosaic_0001>

<llo_original>
// kernel: tpu_custom_call.1
$region0: #{tpu_custom_call.1}
  #allocation0 [shape = 'u32[]', space=smem, size = 0x4, offset = 0x4, fixed_abs, tag = 'smem constant byte address 0x4 - core index']
  #allocation1 [shape = 'u32[144,128]{1,0:T(1,128)}', space=vmem, size = 0x12000, scoped, tag = 'internal scratch']
  %s0 = inlined_call_operand.hbm [shape: f32[2,8], index: 0, kind: input, shape index: {}]
  %s1 = inlined_call_operand.vmem [shape: f32[1,8], index: 1, kind: input, shape index: {}]
  %s2 = inlined_call_operand.vmem [shape: f32[1,8], index: 2, kind: input, shape index: {}]
  %s3 = inlined_call_operand.vmem [shape: f32[1,8], index: 3, kind: input, shape index: {}]
  %s4 = inlined_call_operand.hbm [shape: f32[1,4], index: 4, kind: output, shape index: {}]
  %s5 = sld [smem:[#allocation0]]
  $region30: #{tpu_custom_call.1} parent=0
    _
  %s7 = ssub.s32 1, %s5
  %s8 = scalar_select 0, %s7, %s5
  $region1: #{tpu_custom_call.1} parent=0
    #allocation2 [shape = 'u8[1024]{0}', space=vmem, size = 0x400, scoped, tag = 'input window, operand 0, single buffered']
    #allocation3 [shape = 's32[1]{0}', space=sflag, size = 0x4, scoped, tag = 'scoped memory for tpu_custom_call.1']
    #allocation4 [shape = 's32[1]{0}', space=sflag, size = 0x4, scoped, tag = 'scoped memory for tpu_custom_call.1']
    #allocation5 [shape = 'u8[512]{0}', space=vmem, size = 0x400, scoped, tag = 'output window, operand 0, single buffered']
    %9 = vsyncpa [#allocation3], 0
    %10 = vsyncpa [#allocation4], 0
    // Predicated region
    $region2: #{tpu_custom_call.1} parent=1 // pred_check
      _
    $region3: #{tpu_custom_call.1} parent=1 // pred_check_branch
      %12 = sbr.rel (0) target = $region5
    $region4: #{tpu_custom_call.1} parent=1 // pred_region
      %s14 = ssub.s32 32, 32
      %15 = vsyncadd [#allocation3], %s14
      %s17 = sshll.u32 [#allocation2], 4
      %s18 = int_to_ptr.vmem [resolvable:$true] %s17
      %20 = dma.hbm_to_vmem [thread:$0]  %s0, 32, %s18, [#allocation3]
    $region5: #{tpu_custom_call.1} parent=1 // pred_fallthru
      _
    // Predicated region
    $region6: #{tpu_custom_call.1} parent=1 // pred_check
      _
    $region7: #{tpu_custom_call.1} parent=1 // pred_check_branch
      %22 = sbr.rel (0) target = $region9
    $region8: #{tpu_custom_call.1} parent=1 // pred_region
      _
    $region9: #{tpu_custom_call.1} parent=1 // pred_fallthru
      _
    // Predicated region
    $region10: #{tpu_custom_call.1} parent=1 // pred_check
      _
    $region11: #{tpu_custom_call.1} parent=1 // pred_check_branch
      %24 = sbr.rel (0) target = $region13
    $region12: #{tpu_custom_call.1} parent=1 // pred_region
      _
    $region13: #{tpu_custom_call.1} parent=1 // pred_fallthru
      _
    // Predicated region
    $region14: #{tpu_custom_call.1} parent=1 // pred_check
      _
    $region15: #{tpu_custom_call.1} parent=1 // pred_check_branch
      %26 = sbr.rel (0) target = $region17
    $region16: #{tpu_custom_call.1} parent=1 // pred_region
      _
    $region17: #{tpu_custom_call.1} parent=1 // pred_fallthru
      _
    // Predicated region
    $region18: #{tpu_custom_call.1} parent=1 // pred_check
      _
    $region19: #{tpu_custom_call.1} parent=1 // pred_check_branch
      %28 = sbr.rel (0) target = $region21
    $region20: #{tpu_custom_call.1} parent=1 // pred_region
      %29 = dma.done [#allocation3], 32
    $region21: #{tpu_custom_call.1} parent=1 // pred_fallthru
      _
    %v30 = vld [vmem:[%s1] sm:$0x1]
    %v31 = vld [vmem:[#allocation2] sm:$0x1]
    %v32 = vsub.f32 %v30, %v31
    %v33 = vmul.f32 %v32, %v32
    %vm34 = vcmask 57344
    %v35 = vsel %vm34, %v33, 0.0
    %36 = vadd.xlane.f32.xlu0 %v35
    %v37 = vpop.xlane.xlu0 %36
    %v38 = vmul.f32 %v37, 0.125
    %vm39 = vcmask 0
    %40 = vst.msk [vmem:[#allocation5] sm:$0x1] %vm39, %v38
    %v41 = vadd.f32 %v38, 0.0
    %v42 = vld [vmem:[%s2] sm:$0x1]
    %v43 = vld [vmem:[#allocation2 + $0x1] sm:$0x1]
    %v44 = vsub.f32 %v42, %v43
    %v45 = vmul.f32 %v44, %v44
    %v46 = vsel %vm34, %v45, 0.0
    %47 = vadd.xlane.f32.xlu0 %v46
    %v48 = vpop.xlane.xlu0 %47
    %v49 = vmul.f32 %v48, 0.125
    %vm50 = vcmask 8200
    %51 = vst.msk [vmem:[#allocation5] sm:$0x1] %vm50, %v49
    %v52 = vmul.f32 %v49, 0.5
    %v53 = vadd.f32 %v41, %v52
    %v54 = vld [vmem:[%s3] sm:$0x1]
    %v55 = vld [vmem:[#allocation2] sm:$0x1]
    %v56 = vsub.f32 %v54, %v55
    %v57 = vmul.f32 %v56, %v56
    %v58 = vsel %vm34, %v57, 0.0
    %59 = vadd.xlane.f32.xlu0 %v58
    %v60 = vpop.xlane.xlu0 %59
    %v61 = vmul.f32 %v60, 0.125
    %vm62 = vcmask 16400
    %63 = vst.msk [vmem:[#allocation5] sm:$0x1] %vm62, %v61
    %v64 = vadd.f32 %v53, %v61
    %vm65 = vcmask 24600
    %66 = vst.msk [vmem:[#allocation5] sm:$0x1] %vm65, %v64
    // Predicated region
    $region22: #{tpu_custom_call.1} parent=1 // pred_check
      _
    $region23: #{tpu_custom_call.1} parent=1 // pred_check_branch
      %68 = sbr.rel (0) target = $region25
    $region24: #{tpu_custom_call.1} parent=1 // pred_region
      %s70 = ssub.s32 16, 16
      %71 = vsyncadd [#allocation4], %s70
      %s73 = sshll.u32 [#allocation5], 4
      %s74 = int_to_ptr.vmem [resolvable:$true] %s73
      %76 = dma.vmem_to_hbm [thread:$0]  %s74, 16, %s4, [#allocation4]
    $region25: #{tpu_custom_call.1} parent=1 // pred_fallthru
      _
    // Predicated region
    $region26: #{tpu_custom_call.1} parent=1 // pred_check
      _
    $region27: #{tpu_custom_call.1} parent=1 // pred_check_branch
      %78 = sbr.rel (0) target = $region29
    $region28: #{tpu_custom_call.1} parent=1 // pred_region
      %79 = dma.done [#allocation4], 16
    $region29: #{tpu_custom_call.1} parent=1 // pred_fallthru
      _
    %80 = vsyncpa [#allocation3], 1
    %81 = vsyncpa [#allocation4], 1

</llo_original>
